<compile_context>
chip_gen: v7x
topology: tpu7x:2x2x1
jax: 0.10.0
libtpu: 0.0.40
codegen_flags: <defaults>
</compile_context>

<pallas_src>
from functools import partial

import jax
import jax.numpy as jnp
from jax.experimental import pallas as pl
from jax.experimental.pallas import tpu as pltpu


def _affine_kernel(x_ref, gamma_ref, beta_ref, o_ref):
    # x_ref/o_ref: VMEM (TR, L); gamma_ref/beta_ref: VMEM (TR, 1) per-row params.
    o_ref[...] = x_ref[...] * gamma_ref[...] + beta_ref[...]


def _row_tile(R, L, itemsize, target_bytes=2 << 20):
    """Pick a row-tile: multiple of 8 (or full extent), ~target_bytes per tile,
    dividing R so every block is full (no masked partial stores)."""
    if R <= 8 or R % 8 != 0:
        return R                      # full extent block (always legal)
    tr = max(8, (target_bytes // (L * itemsize)) // 8 * 8)
    tr = min(tr, R)
    while tr > 8 and R % tr != 0:
        tr -= 8
    return tr if R % tr == 0 else R


@partial(jax.jit, static_argnames=("p",), donate_argnums=(0,))
def random_apply(x_nchw, gamma_c, beta_c, key, p):
    """x_nchw: [B, C, H, W] float32 (donated); gamma_c/beta_c: [C]; p: float."""
    B, C, H, W = x_nchw.shape
    R, L = B * C, H * W

    x2d = x_nchw.reshape(R, L)
    # Per-row (= per (batch, channel)) params, built once in the wrapper.
    gamma = jnp.tile(gamma_c.reshape(C, 1), (B, 1)).astype(x2d.dtype)  # (R, 1)
    beta = jnp.tile(beta_c.reshape(C, 1), (B, 1)).astype(x2d.dtype)    # (R, 1)

    # PyTorch: random.random() > p -> identity ; else -> fn(x)
    u = jax.random.uniform(key, (), dtype=jnp.float32)
    apply_fn = u <= jnp.float32(p)

    TR = _row_tile(R, L, x2d.dtype.itemsize)
    grid = (pl.cdiv(R, TR),)

    kernel_call = pl.pallas_call(
        _affine_kernel,
        out_shape=jax.ShapeDtypeStruct((R, L), x2d.dtype),
        grid=grid,
        in_specs=[
            pl.BlockSpec((TR, L), lambda i: (i, 0)),   # x tile (lane-dense)
            pl.BlockSpec((TR, 1), lambda i: (i, 0)),   # gamma per-row
            pl.BlockSpec((TR, 1), lambda i: (i, 0)),   # beta per-row
        ],
        out_specs=pl.BlockSpec((TR, L), lambda i: (i, 0)),
        input_output_aliases={0: 0},                   # donate x buffer to out
        compiler_params=pltpu.CompilerParams(
            dimension_semantics=("parallel",),
            vmem_limit_bytes=32 * 1024 * 1024,
        ),
    )

    # Skip the kernel entirely (no HBM read/write) on the identity draw.
    out2d = jax.lax.cond(
        apply_fn,
        lambda xx: kernel_call(xx, gamma, beta),
        lambda xx: xx,
        x2d,
    )
    return out2d.reshape(B, C, H, W)

    # TODO(synk): for bandwidth-bound production use, consider bf16 I/O
    # (halves HBM bytes); kept f32 here to match the reference bit-for-bit.


if __name__ == "__main__":
    key = jax.random.PRNGKey(0)
    k_x, k_apply = jax.random.split(key)

    B, C, H, W = 2, 4, 16, 16
    x = jax.random.normal(k_x, (B, C, H, W), dtype=jnp.float32)

    # Deterministic params for the wrapped fn (per-channel affine).
    gamma = 1.0 + 0.1 * jnp.arange(C, dtype=jnp.float32)
    beta = 0.01 * jnp.arange(C, dtype=jnp.float32)

    p = 0.5

    # Reference (pure JAX), computed BEFORE the call since x is donated.
    u = jax.random.uniform(k_apply, (), dtype=jnp.float32)
    fn_x = x * gamma.reshape(1, C, 1, 1) + beta.reshape(1, C, 1, 1)
    ref = jax.block_until_ready(jnp.where(u <= p, fn_x, x))

    out = random_apply(x, gamma, beta, k_apply, p=p)
    out = jax.block_until_ready(out)

    assert jnp.allclose(out, ref, atol=1e-6), "mismatch vs reference"
    print("KERNEL_OK")
</pallas_src>

<mosaic_0001>
module attributes {stable_mosaic.version = 11 : i64} {
  func.func @_affine_kernel(%arg0: i32, %arg1: memref<8x256xf32, #tpu.memory_space<vmem>>, %arg2: memref<8x1xf32, #tpu.memory_space<vmem>>, %arg3: memref<8x1xf32, #tpu.memory_space<vmem>>, %arg4: memref<8x256xf32, #tpu.memory_space<vmem>>) attributes {dimension_semantics = [#tpu.dimension_semantics<parallel>], iteration_bounds = array<i64: 1>, scalar_prefetch = 0 : i64, scratch_operands = 0 : i64, tpu.core_type = #tpu.core_type<tc>, window_params = [{transform_indices = @transform_0, window_bounds = array<i64: 8, 256>}, {transform_indices = @transform_1, window_bounds = array<i64: 8, 1>}, {transform_indices = @transform_2, window_bounds = array<i64: 8, 1>}, {transform_indices = @transform_3, window_bounds = array<i64: 8, 256>}]} {
    %c0 = arith.constant 0 : index
    %c0_0 = arith.constant 0 : index
    %0 = vector.load %arg1[%c0, %c0_0] : memref<8x256xf32, #tpu.memory_space<vmem>>, vector<8x256xf32>
    %c0_1 = arith.constant 0 : index
    %c0_2 = arith.constant 0 : index
    %1 = vector.load %arg2[%c0_1, %c0_2] : memref<8x1xf32, #tpu.memory_space<vmem>>, vector<8x1xf32>
    %2 = vector.broadcast %1 : vector<8x1xf32> to vector<8x256xf32>
    %3 = arith.mulf %0, %2 : vector<8x256xf32>
    %c0_3 = arith.constant 0 : index
    %c0_4 = arith.constant 0 : index
    %4 = vector.load %arg3[%c0_3, %c0_4] : memref<8x1xf32, #tpu.memory_space<vmem>>, vector<8x1xf32>
    %5 = vector.broadcast %4 : vector<8x1xf32> to vector<8x256xf32>
    %6 = arith.addf %3, %5 : vector<8x256xf32>
    %c0_5 = arith.constant 0 : index
    %c0_6 = arith.constant 0 : index
    %7 = vector.load %arg4[%c0_5, %c0_6] : memref<8x256xf32, #tpu.memory_space<vmem>>, vector<8x256xf32>
    tpu.vector_store %arg4[%c0_5, %c0_6], %6 {strides = array<i32>} : memref<8x256xf32, #tpu.memory_space<vmem>>, vector<8x256xf32>,
    return
  }
  func.func @transform_0(%arg0: i32) -> (i32, i32) {
    %c0_i32 = arith.constant 0 : i32
    %c0_i32_0 = arith.constant 0 : i32
    return %arg0, %c0_i32 : i32, i32
  }
  func.func @transform_1(%arg0: i32) -> (i32, i32) {
    %c0_i32 = arith.constant 0 : i32
    %c0_i32_0 = arith.constant 0 : i32
    return %arg0, %c0_i32 : i32, i32
  }
  func.func @transform_2(%arg0: i32) -> (i32, i32) {
    %c0_i32 = arith.constant 0 : i32
    %c0_i32_0 = arith.constant 0 : i32
    return %arg0, %c0_i32 : i32, i32
  }
  func.func @transform_3(%arg0: i32) -> (i32, i32) {
    %c0_i32 = arith.constant 0 : i32
    %c0_i32_0 = arith.constant 0 : i32
    return %arg0, %c0_i32 : i32, i32
  }
}

</mosaic_0001>

<llo_original>
// kernel: branch_1_fun.1
$region0: #{branch_1_fun.1}
  #allocation0 [shape = 'u32[]', space=smem, size = 0x4, offset = 0x4, fixed_abs, tag = 'smem constant byte address 0x4 - core index']
  #allocation1 [shape = 'u32[144,128]{1,0:T(1,128)}', space=vmem, size = 0x12000, scoped, tag = 'internal scratch']
  %s0 = inlined_call_operand.vmem [shape: f32[8,256], index: 0, kind: input, shape index: {}, may-alias: {0,3}]
  %s1 = inlined_call_operand.vmem [shape: f32[8,1], index: 1, kind: input, shape index: {}]
  %s2 = inlined_call_operand.vmem [shape: f32[8,1], index: 2, kind: input, shape index: {}]
  %s3 = inlined_call_operand.vmem [shape: f32[8,256], index: 3, kind: output, shape index: {}, may-alias: {0,3}]
  %s4 = sld [smem:[#allocation0]]
  $region22: #{branch_1_fun.1} parent=0
    _
  %s6 = ssub.s32 1, %s4
  %s7 = scalar_select 0, %s6, %s4
  // Predicated region
  $region2: #{branch_1_fun.1} parent=0 // pred_check
    _
  $region3: #{branch_1_fun.1} parent=0 // pred_check_branch
    %9 = sbr.rel (0) target = $region5
  $region4: #{branch_1_fun.1} parent=0 // pred_region
    _
  $region5: #{branch_1_fun.1} parent=0 // pred_fallthru
    _
  // Predicated region
  $region6: #{branch_1_fun.1} parent=0 // pred_check
    _
  $region7: #{branch_1_fun.1} parent=0 // pred_check_branch
    %11 = sbr.rel (0) target = $region9
  $region8: #{branch_1_fun.1} parent=0 // pred_region
    _
  $region9: #{branch_1_fun.1} parent=0 // pred_fallthru
    _
  // Predicated region
  $region10: #{branch_1_fun.1} parent=0 // pred_check
    _
  $region11: #{branch_1_fun.1} parent=0 // pred_check_branch
    %13 = sbr.rel (0) target = $region13
  $region12: #{branch_1_fun.1} parent=0 // pred_region
    _
  $region13: #{branch_1_fun.1} parent=0 // pred_fallthru
    _
  %v14 = vld [vmem:[%s0] sm:$0xff]
  %v15 = vld [vmem:[%s0 + $0x8] sm:$0xff]
  %v16 = vld [vmem:[%s1] sm:$0xff]
  %18 = vset.pattern.permute.xlu0 0
  %19 = vperm.xlu0 %18, %v16
  %v20 = vpop.permute.xlu0 %19
  %v22 = vmul.f32 %v14, %v20
  %v23 = vmul.f32 %v15, %v20
  %v24 = vld [vmem:[%s2] sm:$0xff]
  %26 = vset.pattern.permute.xlu0 0
  %27 = vperm.xlu0 %26, %v24
  %v28 = vpop.permute.xlu0 %27
  %v30 = vadd.f32 %v22, %v28
  %v31 = vadd.f32 %v23, %v28
  %32 = vst [vmem:[%s3] sm:$0xff] %v30
  %33 = vst [vmem:[%s3 + $0x8] sm:$0xff] %v31
  // Predicated region
  $region14: #{branch_1_fun.1} parent=0 // pred_check
    _
  $region15: #{branch_1_fun.1} parent=0 // pred_check_branch
    %35 = sbr.rel (0) target = $region17
  $region16: #{branch_1_fun.1} parent=0 // pred_region
    _
  $region17: #{branch_1_fun.1} parent=0 // pred_fallthru
    _
  // Predicated region
  $region18: #{branch_1_fun.1} parent=0 // pred_check
    _
  $region19: #{branch_1_fun.1} parent=0 // pred_check_branch
    %37 = sbr.rel (0) target = $region21
  $region20: #{branch_1_fun.1} parent=0 // pred_region
    _
  $region21: #{branch_1_fun.1} parent=0 // pred_fallthru
    _

</llo_original>
